<compile_context>
chip_gen: v7x
topology: tpu7x:2x2x1
jax: 0.10.0
libtpu: 0.0.40
codegen_flags: <defaults>
</compile_context>

<pallas_src>
import functools

import numpy as np
import jax
import jax.numpy as jnp
from jax.experimental import pallas as pl
from jax.experimental.pallas import tpu as pltpu

EPS = 1e-5


def _round_up(v, m):
    return (v + m - 1) // m * m


def _cdiv(a, b):
    return -(-a // b)


# ---------------------------------------------------------------------------
# Kernel A (packed / im2col path): one lane-dense matmul per grid step.
# ---------------------------------------------------------------------------
def _packed_kernel(x_ref, w_ref, b_ref, o_ref):
    # x_ref : (Bt, Lt, KC_p)   bf16  im2col'd activations (taps packed on lanes)
    # w_ref : (KC_p, Cout_p)   bf16  BN-folded, tap-packed conv weights
    # b_ref : (1, Cout_p)      f32   BN-folded bias
    # o_ref : (Bt, Lt, Cout_p) bf16
    Bt, Lt, KC = x_ref.shape
    Cout = o_ref.shape[-1]
    x = x_ref[...].reshape(Bt * Lt, KC)                  # bf16, layout-free
    acc = jnp.dot(x, w_ref[...], preferred_element_type=jnp.float32)
    y = jnp.maximum(acc + b_ref[...], 0.0)               # bias + folded BN + ReLU
    o_ref[...] = y.reshape(Bt, Lt, Cout).astype(o_ref.dtype)


# ---------------------------------------------------------------------------
# Kernel B (general path): per-tap matmul with an un-rolled bf16 LHS; the
# halo shift is applied to the matmul output on the XLU (row permutation
# commutes with the matmul) and masked with a (M,1) multiply.
# ---------------------------------------------------------------------------
def _roll_kernel(x_ref, w_ref, b_ref, o_ref, *, shifts, padded_len):
    # x_ref : (Bt, Lp, Cin_p)    bf16
    # w_ref : (K, Cin_p, Cout_p) bf16
    # b_ref : (1, Cout_p)        f32
    # o_ref : (Bt, Lp, Cout_p)   bf16
    Bt, Lp, Cin = x_ref.shape
    Cout = o_ref.shape[-1]
    M = Bt * Lp

    x = x_ref[...].reshape(M, Cin)          # stays bf16 (no f32 round trip)
    # Row position inside its own (padded) sequence, for halo masking.
    pos = jax.lax.broadcasted_iota(jnp.int32, (M, 1), 0) % padded_len

    acc = jnp.zeros((M, Cout), jnp.float32)
    for t, d in enumerate(shifts):          # K is small & static
        z = jnp.dot(x, w_ref[t], preferred_element_type=jnp.float32)
        if d != 0:
            # Shift the output rows on the XLU; the MXU LHS is identical for
            # every tap so matmul pushes stream back-to-back.
            z = pltpu.roll(z, shift=(-d) % M, axis=0)
            # Rows whose source index fell outside [0, padded_len) (including
            # rows that wrapped into a neighbouring batch element) contribute
            # zero — the conv's zero padding. Rows sourcing the zero-padded
            # tail [L, padded_len) rely on the wrapper's explicit jnp.pad.
            valid = jnp.logical_and(pos + d >= 0, pos + d < padded_len)
            z = z * valid.astype(z.dtype)
        acc = acc + z

    y = jnp.maximum(acc + b_ref[...], 0.0)
    o_ref[...] = y.reshape(Bt, Lp, Cout).astype(o_ref.dtype)


# ---------------------------------------------------------------------------
# Wrapper
# ---------------------------------------------------------------------------
def conv_block_forward(x, weight, bias, gamma=None, beta=None,
                       running_mean=None, running_var=None, *,
                       kernel_size=3, stride=1, dilation=1, padding="same",
                       use_bn=True, eps=EPS, target_rows=2048):
    """ConvBlock forward.

    x      : (B, Cin, L)     float32 (PyTorch NCL)
    weight : (Cout, Cin, K)  float32 (PyTorch Conv1d layout)
    Returns (B, Cout, Lout) float32.
    """
    B, Cin, L = x.shape
    Cout, _, K = weight.shape
    assert K == kernel_size

    # ConvBlock passes (in, out, k, padding, stride, dilation) positionally to
    # nn.Conv1d(in, out, k, stride, padding, dilation): 4th/5th args swap.
    pad_arg = kernel_size // 2 * dilation if padding == "same" else padding
    eff_stride, eff_pad = pad_arg, stride               # the positional swap
    assert eff_stride >= 1

    Lout = (L + 2 * eff_pad - dilation * (K - 1) - 1) // eff_stride + 1
    assert Lout >= 1

    # Fold eval-mode BatchNorm1d into the conv weights / bias.
    if use_bn:
        scale = gamma / jnp.sqrt(running_var + eps)                 # (Cout,)
        w_f = weight * scale[:, None, None]
        b_f = bias * scale + beta - running_mean * scale
    else:
        w_f, b_f = weight, bias

    # NCL -> NLC (bf16), (Cout, Cin, K) -> (K, Cin, Cout).
    # TODO(synk): this transpose/cast/pad is an extra HBM pass before the
    # kernel; pre-staging activations in NLC/bf16 in the surrounding model
    # (or emitting NCL directly from the kernel) would remove it.
    x_nlc = jnp.transpose(x, (0, 2, 1)).astype(jnp.bfloat16)
    w_kic = jnp.transpose(w_f, (2, 1, 0)).astype(jnp.bfloat16)
    b_f32 = b_f.astype(jnp.float32)

    Cout_p = _round_up(Cout, 128)
    b_pad = jnp.pad(b_f32, (0, Cout_p - Cout)).reshape(1, -1)

    KC = K * Cin
    Cin_p = _round_up(Cin, 128)
    KC_p = _round_up(KC, 128)
    # TODO(synk): on v6e/v7x (256-wide MXUs) pad channels >= 128 to 256.

    packed = KC_p <= Cin_p          # tap packing costs no extra HBM traffic
    vmem_budget = 40 << 20

    if packed:
        # ---- im2col along channels in the wrapper: 1 matmul per grid step,
        # no rolls, no masks; halo baked in so L tiles need no halo either.
        xp = jnp.pad(x_nlc, ((0, 0), (eff_pad, eff_pad), (0, 0)))
        taps = [xp[:, t * dilation:
                   t * dilation + eff_stride * (Lout - 1) + 1: eff_stride, :]
                for t in range(K)]
        x_im = jnp.concatenate(taps, axis=-1)            # (B, Lout, K*Cin)

        w_pack = w_kic.reshape(KC, Cout)
        w_pad = jnp.pad(w_pack, ((0, KC_p - KC), (0, Cout_p - Cout)))

        Lp = _round_up(Lout, 16)
        Lt = min(Lp, _round_up(target_rows, 16))
        if B == 1 and Lp >= 32:
            # keep >= 2 parallel steps for v7x's two TensorCores
            Lt = min(Lt, _round_up(_cdiv(Lp, 2), 16))
        Bt = max(1, min(B, max(1, target_rows // Lt)))
        if B > 1 and _cdiv(B, Bt) * _cdiv(Lp, Lt) < 2:
            Bt = _cdiv(B, 2)

        def est(bt, lt):
            return (2 * bt * lt * KC_p * 2              # input (double-buffered)
                    + 2 * bt * lt * Cout_p * 2          # output (double-buffered)
                    + bt * lt * (KC_p * 2 + Cout_p * 4)  # in-kernel temporaries
                    + 2 * KC_p * Cout_p * 2 + 2 * Cout_p * 4)

        while Bt > 1 and est(Bt, Lt) > vmem_budget:
            Bt = _cdiv(Bt, 2)
        while Lt > 16 and est(Bt, Lt) > vmem_budget:
            Lt = max(16, _round_up(Lt // 2, 16))

        n_l, n_b = _cdiv(Lp, Lt), _cdiv(B, Bt)
        Lpad, Bp = n_l * Lt, n_b * Bt

        x_pad = jnp.pad(x_im, ((0, Bp - B), (0, Lpad - Lout), (0, KC_p - KC)))

        out = pl.pallas_call(
            _packed_kernel,
            out_shape=jax.ShapeDtypeStruct((Bp, Lpad, Cout_p), jnp.bfloat16),
            grid=(n_b, n_l),
            in_specs=[
                pl.BlockSpec((Bt, Lt, KC_p), lambda i, j: (i, j, 0)),
                pl.BlockSpec((KC_p, Cout_p), lambda i, j: (0, 0)),
                pl.BlockSpec((1, Cout_p), lambda i, j: (0, 0)),
            ],
            out_specs=pl.BlockSpec((Bt, Lt, Cout_p), lambda i, j: (i, j, 0)),
            compiler_params=pltpu.CompilerParams(
                dimension_semantics=("parallel", "parallel"),
                vmem_limit_bytes=int(min(56 << 20,
                                         max(32 << 20,
                                             est(Bt, Lt) + (4 << 20))))),
        )(x_pad, w_pad, b_pad)

    else:
        # ---- general path: per-tap matmul + output roll/mask in-kernel.
        assert eff_stride == 1, "large K*Cin path supports effective stride 1"
        # TODO(synk): effective stride > 1 with large K*Cin not implemented.
        # TODO(synk): very long L would want an L-tile grid axis with halo;
        # very large Cin/Cout would want Cout-parallel / Cin-reduction tiling.

        Lp = _round_up(max(L, Lout), 16)
        Bt = max(1, min(B, max(1, target_rows // Lp)))
        if B > 1 and _cdiv(B, Bt) < 2:
            Bt = _cdiv(B, 2)

        def est(bt):
            return (2 * bt * Lp * Cin_p * 2
                    + 2 * bt * Lp * Cout_p * 2
                    + bt * Lp * (Cin_p * 2 + 2 * Cout_p * 4)
                    + 2 * K * Cin_p * Cout_p * 2 + 2 * Cout_p * 4)

        while Bt > 1 and est(Bt) > vmem_budget:
            Bt = _cdiv(Bt, 2)

        n_b = _cdiv(B, Bt)
        Bp = n_b * Bt

        x_pad = jnp.pad(x_nlc, ((0, Bp - B), (0, Lp - L), (0, Cin_p - Cin)))
        w_pad = jnp.pad(w_kic, ((0, 0), (0, Cin_p - Cin), (0, Cout_p - Cout)))
        shifts = tuple(t * dilation - eff_pad for t in range(K))

        out = pl.pallas_call(
            functools.partial(_roll_kernel, shifts=shifts, padded_len=Lp),
            out_shape=jax.ShapeDtypeStruct((Bp, Lp, Cout_p), jnp.bfloat16),
            grid=(n_b,),
            in_specs=[
                pl.BlockSpec((Bt, Lp, Cin_p), lambda i: (i, 0, 0)),
                pl.BlockSpec((K, Cin_p, Cout_p), lambda i: (0, 0, 0)),
                pl.BlockSpec((1, Cout_p), lambda i: (0, 0)),
            ],
            out_specs=pl.BlockSpec((Bt, Lp, Cout_p), lambda i: (i, 0, 0)),
            compiler_params=pltpu.CompilerParams(
                dimension_semantics=("parallel",),
                vmem_limit_bytes=int(min(56 << 20,
                                         max(32 << 20, est(Bt) + (4 << 20))))),
        )(x_pad, w_pad, b_pad)

    # bf16 kernel output -> f32 NCL; the cast rides the existing slice+transpose.
    return jnp.transpose(out[:B, :Lout, :Cout], (0, 2, 1)).astype(jnp.float32)


# ---------------------------------------------------------------------------
# Pure-JAX reference (f32) for correctness checking
# ---------------------------------------------------------------------------
def conv_block_reference(x, weight, bias, gamma, beta, mean, var, *,
                         kernel_size=3, stride=1, dilation=1, padding="same",
                         use_bn=True, eps=EPS):
    pad_arg = kernel_size // 2 * dilation if padding == "same" else padding
    eff_stride, eff_pad = pad_arg, stride
    y = jax.lax.conv_general_dilated(
        x, weight, window_strides=(eff_stride,),
        padding=[(eff_pad, eff_pad)], rhs_dilation=(dilation,),
        dimension_numbers=("NCH", "OIH", "NCH"))
    y = y + bias[None, :, None]
    if use_bn:
        inv = gamma / jnp.sqrt(var + eps)
        y = (y - mean[None, :, None]) * inv[None, :, None] + beta[None, :, None]
    return jnp.maximum(y, 0.0)


# ---------------------------------------------------------------------------
def _run_case(seed, B, Cin, Cout, L, K):
    key = jax.random.PRNGKey(seed)
    kx, kw, kb, kg, kbe, km, kv = jax.random.split(key, 7)

    x = jax.random.normal(kx, (B, Cin, L), jnp.float32)
    weight = jax.random.normal(kw, (Cout, Cin, K), jnp.float32) / np.sqrt(Cin * K)
    bias = 0.1 * jax.random.normal(kb, (Cout,), jnp.float32)
    gamma = 1.0 + 0.2 * jax.random.normal(kg, (Cout,), jnp.float32)
    beta = 0.1 * jax.random.normal(kbe, (Cout,), jnp.float32)
    running_mean = 0.1 * jax.random.normal(km, (Cout,), jnp.float32)
    running_var = 1.0 + 0.2 * jax.random.uniform(kv, (Cout,), jnp.float32)

    fwd = jax.jit(functools.partial(conv_block_forward, kernel_size=K))
    out = fwd(x, weight, bias, gamma, beta, running_mean, running_var)
    jax.block_until_ready(out)

    ref = conv_block_reference(x, weight, bias, gamma, beta, running_mean,
                               running_var, kernel_size=K)
    assert out.shape == ref.shape == (B, Cout, L)
    np.testing.assert_allclose(np.asarray(out), np.asarray(ref),
                               rtol=5e-2, atol=5e-2)   # bf16 operand tolerance


if __name__ == "__main__":
    # Packed (im2col) path: K*Cin = 24 <= 128.
    _run_case(0, B=4, Cin=8, Cout=16, L=32, K=3)
    # General (roll) path: K*Cin = 144 > 128.
    _run_case(0, B=2, Cin=48, Cout=24, L=24, K=3)
    print("KERNEL_OK")
</pallas_src>

<mosaic_0001>
module attributes {stable_mosaic.version = 11 : i64} {
  func.func @_packed_kernel(%arg0: i32, %arg1: i32, %arg2: memref<2x32x128xbf16, #tpu.memory_space<vmem>>, %arg3: memref<128x128xbf16, #tpu.memory_space<vmem>>, %arg4: memref<1x128xf32, #tpu.memory_space<vmem>>, %arg5: memref<2x32x128xbf16, #tpu.memory_space<vmem>>) attributes {dimension_semantics = [#tpu.dimension_semantics<parallel>, #tpu.dimension_semantics<parallel>], iteration_bounds = array<i64: 2, 1>, scalar_prefetch = 0 : i64, scratch_operands = 0 : i64, tpu.core_type = #tpu.core_type<tc>, window_params = [{transform_indices = @transform_0, window_bounds = array<i64: 2, 32, 128>}, {pipeline_mode = #tpu.pipeline_mode<synchronous>, transform_indices = @transform_1, window_bounds = array<i64: 128, 128>}, {pipeline_mode = #tpu.pipeline_mode<synchronous>, transform_indices = @transform_2, window_bounds = array<i64: 1, 128>}, {transform_indices = @transform_3, window_bounds = array<i64: 2, 32, 128>}]} {
    %c0 = arith.constant 0 : index
    %c0_0 = arith.constant 0 : index
    %c0_1 = arith.constant 0 : index
    %0 = vector.load %arg2[%c0, %c0_0, %c0_1] : memref<2x32x128xbf16, #tpu.memory_space<vmem>>, vector<2x32x128xbf16>
    %1 = vector.shape_cast %0 : vector<2x32x128xbf16> to vector<64x128xbf16>
    %c0_2 = arith.constant 0 : index
    %c0_3 = arith.constant 0 : index
    %2 = vector.load %arg3[%c0_2, %c0_3] : memref<128x128xbf16, #tpu.memory_space<vmem>>, vector<128x128xbf16>
    %cst = arith.constant dense<0.000000e+00> : vector<64x128xf32>
    %3 = tpu.matmul %1, %2, %cst {dimension_numbers = #tpu.dot_dimension_numbers<[1], [0], [0], [1], [0, 0, 1, 1], [], []>} : vector<64x128xbf16>, vector<128x128xbf16>, vector<64x128xf32> -> vector<64x128xf32>
    %c0_4 = arith.constant 0 : index
    %c0_5 = arith.constant 0 : index
    %4 = vector.load %arg4[%c0_4, %c0_5] : memref<1x128xf32, #tpu.memory_space<vmem>>, vector<1x128xf32>
    %5 = vector.broadcast %4 : vector<1x128xf32> to vector<64x128xf32>
    %6 = arith.addf %3, %5 : vector<64x128xf32>
    %cst_6 = arith.constant 0.000000e+00 : f32
    %7 = vector.broadcast %cst_6 : f32 to vector<64x128xf32>
    %8 = arith.maximumf %6, %7 : vector<64x128xf32>
    %9 = vector.shape_cast %8 : vector<64x128xf32> to vector<2x32x128xf32>
    %10 = arith.truncf %9 : vector<2x32x128xf32> to vector<2x32x128xbf16>
    %c0_7 = arith.constant 0 : index
    %c0_8 = arith.constant 0 : index
    %c0_9 = arith.constant 0 : index
    %11 = vector.load %arg5[%c0_7, %c0_8, %c0_9] : memref<2x32x128xbf16, #tpu.memory_space<vmem>>, vector<2x32x128xbf16>
    tpu.vector_store %arg5[%c0_7, %c0_8, %c0_9], %10 {strides = array<i32>} : memref<2x32x128xbf16, #tpu.memory_space<vmem>>, vector<2x32x128xbf16>,
    return
  }
  func.func @transform_0(%arg0: i32, %arg1: i32) -> (i32, i32, i32) {
    %c0_i32 = arith.constant 0 : i32
    %c0_i32_0 = arith.constant 0 : i32
    return %arg0, %arg1, %c0_i32 : i32, i32, i32
  }
  func.func @transform_1(%arg0: i32, %arg1: i32) -> (i32, i32) {
    %c0_i32 = arith.constant 0 : i32
    %c0_i32_0 = arith.constant 0 : i32
    %c0_i32_1 = arith.constant 0 : i32
    return %c0_i32, %c0_i32_0 : i32, i32
  }
  func.func @transform_2(%arg0: i32, %arg1: i32) -> (i32, i32) {
    %c0_i32 = arith.constant 0 : i32
    %c0_i32_0 = arith.constant 0 : i32
    %c0_i32_1 = arith.constant 0 : i32
    return %c0_i32, %c0_i32_0 : i32, i32
  }
  func.func @transform_3(%arg0: i32, %arg1: i32) -> (i32, i32, i32) {
    %c0_i32 = arith.constant 0 : i32
    %c0_i32_0 = arith.constant 0 : i32
    return %arg0, %arg1, %c0_i32 : i32, i32, i32
  }
}

</mosaic_0001>

<llo_original>
// kernel: conv_block_forward.1
$region0: #{conv_block_forward.1}
  #allocation0 [shape = 'u32[]', space=smem, size = 0x4, offset = 0x4, fixed_abs, tag = 'smem constant byte address 0x4 - core index']
  #allocation1 [shape = 'u32[144,128]{1,0:T(1,128)}', space=vmem, size = 0x12000, scoped, tag = 'internal scratch']
  %s0 = inlined_call_operand.vmem [shape: bf16[4,32,128], index: 0, kind: input, shape index: {}]
  %s1 = inlined_call_operand.vmem [shape: bf16[128,128], index: 1, kind: input, shape index: {}]
  %s2 = inlined_call_operand.vmem [shape: f32[1,128], index: 2, kind: input, shape index: {}]
  %s3 = inlined_call_operand.vmem [shape: bf16[4,32,128], index: 3, kind: output, shape index: {}]
  %s4 = sld [smem:[#allocation0]]
  $region45: #{conv_block_forward.1} parent=0
    _
  %s6 = ssub.s32 1, %s4
  %s7 = scalar_select 0, %s6, %s4
  loop: start=0, step=1, limit=4
  $region2: #{conv_block_forward.1} parent=0 // loop_pre_header
    _
  $region3: #{conv_block_forward.1} parent=0 // loop_header
    %s9 = sphi 0, %s13
    %p10 = scmp.ge.s32.totalorder %s9, 4
    %s16 = sphi 0, %s28
    %s17 = sphi 0, %s24
    %s18 = sphi 0, %s16
    %s19 = sphi 0, %s17
    %s20 = sphi 0, %s18
    %s21 = sphi 0, %s19
    %s33 = sphi 0, %s35
    %s36 = sphi 0, %s33
    %s37 = sphi 0, %s36
    %s53 = sphi 0, %s37
    %s57 = sphi 0, %s57
    %s59 = sphi 0, %s57
    %s60 = sphi 0, %s59
    %s74 = sphi 0, %s60
    %s78 = sphi 0, %s78
    %s80 = sphi 0, %s78
    %s81 = sphi 0, %s80
    %s95 = sphi 0, %s81
    %s103 = sphi 0, %s105
    %s106 = sphi 0, %s103
    %s107 = sphi 0, %s106
    %s123 = sphi 0, %s107
  $region4: #{conv_block_forward.1} parent=0 // loop_header_branch
    %12 = sbr.rel (%p10) target = $region8
  $region5: #{conv_block_forward.1} parent=0 // loop_body
    %s14 = ssub.s32 %s9, 1
    %s15 = ssub.s32 %s9, 2
    %s22 = sadd.s32 1, %s17
    %p23 = scmp.ge.s32.totalorder %s22, 1
    %s24 = scalar_select %p23, 0, %s22
    %s25 = sadd.s32 1, %s16
    %s26 = scalar_select %p23, %s25, %s16
    %p27 = scmp.ge.s32.totalorder %s26, 2
    %s28 = scalar_select %p27, 0, %s26
    %s29 = ssub.s32 %s16, %s28
    %s30 = ssub.s32 %s17, %s24
    %s31 = sor.u32 %s29, %s30
    %p32 = scmp.eq.s32.totalorder %s31, 0
    %s34 = sadd.s32 %s33, 1
    %s35 = scalar_select %p32, %s33, %s34
    %p38 = pneg %p32
    %p39 = scmp.eq.s32.totalorder %s9, 1
    %p40 = por %p38, %p39
    %p41 = scmp.ne.s32.totalorder %s33, %s36
    %p42 = scmp.eq.s32.totalorder %s9, 0
    %p43 = por %p41, %p42
    %p44 = scmp.ne.s32.totalorder %s33, %s36
    %p45 = scmp.eq.s32.totalorder %s14, 1
    %p46 = por %p44, %p45
    %p47 = scmp.ne.s32.totalorder %s36, %s37
    %p48 = scmp.eq.s32.totalorder %s14, 0
    %p49 = por %p47, %p48
    %p50 = scmp.ne.s32.totalorder %s36, %s37
    %p51 = scmp.eq.s32.totalorder %s15, 1
    %p52 = por %p50, %p51
    %p54 = scmp.ne.s32.totalorder %s37, %s53
    %p55 = scmp.eq.s32.totalorder %s15, 0
    %p56 = por %p54, %p55
    %s58 = sadd.s32 %s57, 1
    %p61 = scmp.eq.s32.totalorder %s9, 1
    %p62 = scmp.ne.s32.totalorder %s57, %s59
    %p63 = scmp.eq.s32.totalorder %s9, 0
    %p64 = por %p62, %p63
    %p65 = scmp.ne.s32.totalorder %s57, %s59
    %p66 = scmp.eq.s32.totalorder %s14, 1
    %p67 = por %p65, %p66
    %p68 = scmp.ne.s32.totalorder %s59, %s60
    %p69 = scmp.eq.s32.totalorder %s14, 0
    %p70 = por %p68, %p69
    %p71 = scmp.ne.s32.totalorder %s59, %s60
    %p72 = scmp.eq.s32.totalorder %s15, 1
    %p73 = por %p71, %p72
    %p75 = scmp.ne.s32.totalorder %s60, %s74
    %p76 = scmp.eq.s32.totalorder %s15, 0
    %p77 = por %p75, %p76
    %s79 = sadd.s32 %s78, 1
    %p82 = scmp.eq.s32.totalorder %s9, 1
    %p83 = scmp.ne.s32.totalorder %s78, %s80
    %p84 = scmp.eq.s32.totalorder %s9, 0
    %p85 = por %p83, %p84
    %p86 = scmp.ne.s32.totalorder %s78, %s80
    %p87 = scmp.eq.s32.totalorder %s14, 1
    %p88 = por %p86, %p87
    %p89 = scmp.ne.s32.totalorder %s80, %s81
    %p90 = scmp.eq.s32.totalorder %s14, 0
    %p91 = por %p89, %p90
    %p92 = scmp.ne.s32.totalorder %s80, %s81
    %p93 = scmp.eq.s32.totalorder %s15, 1
    %p94 = por %p92, %p93
    %p96 = scmp.ne.s32.totalorder %s81, %s95
    %p97 = scmp.eq.s32.totalorder %s15, 0
    %p98 = por %p96, %p97
    %s99 = ssub.s32 %s16, %s28
    %s100 = ssub.s32 %s17, %s24
    %s101 = sor.u32 %s99, %s100
    %p102 = scmp.eq.s32.totalorder %s101, 0
    %s104 = sadd.s32 %s103, 1
    %s105 = scalar_select %p102, %s103, %s104
    %p108 = pneg %p102
    %p109 = scmp.eq.s32.totalorder %s9, 1
    %p110 = por %p108, %p109
    %p111 = scmp.ne.s32.totalorder %s103, %s106
    %p112 = scmp.eq.s32.totalorder %s9, 0
    %p113 = por %p111, %p112
    %p114 = scmp.ne.s32.totalorder %s103, %s106
    %p115 = scmp.eq.s32.totalorder %s14, 1
    %p116 = por %p114, %p115
    %p117 = scmp.ne.s32.totalorder %s106, %s107
    %p118 = scmp.eq.s32.totalorder %s14, 0
    %p119 = por %p117, %p118
    %p120 = scmp.ne.s32.totalorder %s106, %s107
    %p121 = scmp.eq.s32.totalorder %s15, 1
    %p122 = por %p120, %p121
    %p124 = scmp.ne.s32.totalorder %s107, %s123
    %p125 = scmp.eq.s32.totalorder %s15, 0
    %p126 = por %p124, %p125
    %p127 = scmp.le.s32.totalorder 1, %s9
    %p128 = scmp.lt.s32.totalorder %s9, 3
    %p129 = pnand %p127, %p128
    %p130 = pneg %p129
    // Predicated region
    $region9: #{conv_block_forward.1} parent=5 // pred_check
      _
    $region10: #{conv_block_forward.1} parent=5 // pred_check_branch
      %132 = sbr.rel (%p129) target = $region12
    $region11: #{conv_block_forward.1} parent=5 // pred_region
      %s133 = ssub.s32 %s9, 1
      // Predicated region
      $region13: #{conv_block_forward.1} parent=11 // pred_check
        %p134 = pneg %p70
      $region14: #{conv_block_forward.1} parent=11 // pred_check_branch
        %136 = sbr.rel (%p134) target = $region16
      $region15: #{conv_block_forward.1} parent=11 // pred_region
        _
      $region16: #{conv_block_forward.1} parent=11 // pred_fallthru
        _
      // Predicated region
      $region17: #{conv_block_forward.1} parent=11 // pred_check
        %p137 = pneg %p91
      $region18: #{conv_block_forward.1} parent=11 // pred_check_branch
        %139 = sbr.rel (%p137) target = $region20
      $region19: #{conv_block_forward.1} parent=11 // pred_region
        _
      $region20: #{conv_block_forward.1} parent=11 // pred_fallthru
        _
    $region12: #{conv_block_forward.1} parent=5 // pred_fallthru
      _
    %p140 = scmp.lt.s32.totalorder %s9, 2
    // Predicated region
    $region21: #{conv_block_forward.1} parent=5 // pred_check
      %p141 = pneg %p140
    $region22: #{conv_block_forward.1} parent=5 // pred_check_branch
      %143 = sbr.rel (%p141) target = $region24
    $region23: #{conv_block_forward.1} parent=5 // pred_region
      // Predicated region
      $region25: #{conv_block_forward.1} parent=23 // pred_check
        %p144 = pneg %p43
      $region26: #{conv_block_forward.1} parent=23 // pred_check_branch
        %146 = sbr.rel (%p144) target = $region28
      $region27: #{conv_block_forward.1} parent=23 // pred_region
        %s147 = smul.u32 2, %s16
        %s148 = smul.u32 4, %s17
        %p149 = scmp.lt.s32.totalorder %s147, 3
        %s150 = scalar_select %p149, %s147, 3
        %p151 = scmp.lt.s32.totalorder %s148, 3
        %s152 = scalar_select %p151, %s148, 3
        %s153 = smul.addr %s150, 4
        %s154 = sadd.s32 %s152, %s153
        %s155 = smul.addr %s154, 4
        %s156 = scalar_lea.vmem %s0, %s155
        %s157 = smul.u32 2, %s16
        %s158 = smul.u32 4, %s17
      $region28: #{conv_block_forward.1} parent=23 // pred_fallthru
        _
    $region24: #{conv_block_forward.1} parent=5 // pred_fallthru
      _
    %p159 = scmp.le.s32.totalorder 1, %s9
    %p160 = scmp.lt.s32.totalorder %s9, 3
    %p161 = pnand %p159, %p160
    %p162 = pneg %p161
    // Predicated region
    $region29: #{conv_block_forward.1} parent=5 // pred_check
      _
    $region30: #{conv_block_forward.1} parent=5 // pred_check_branch
      %164 = sbr.rel (%p161) target = $region32
    $region31: #{conv_block_forward.1} parent=5 // pred_region
      %s165 = ssub.s32 %s9, 1
      %s166 = smul.u32 2, %s18
      %s167 = smul.u32 4, %s19
      %p168 = scmp.lt.s32.totalorder %s166, 3
      %s169 = scalar_select %p168, %s166, 3
      %p170 = scmp.lt.s32.totalorder %s167, 3
      %s171 = scalar_select %p170, %s167, 3
      %s172 = smul.addr %s169, 4
      %s173 = sadd.s32 %s171, %s172
      %s174 = smul.addr %s173, 4
      %s175 = scalar_lea.vmem %s0, %s174
      %p176 = pneg %p49
      %p177 = pneg %p46
      %p178 = pneg %p70
      %p179 = pneg %p67
      %p180 = pneg %p91
      %p181 = pneg %p88
      %p182 = pneg %p119
      %p183 = pneg %p116
      %s184 = smul.u32 2, %s18
      %s185 = smul.u32 4, %s19
      %p186 = scmp.lt.s32.totalorder %s184, 3
      %s187 = scalar_select %p186, %s184, 3
      %p188 = scmp.lt.s32.totalorder %s185, 3
      %s189 = scalar_select %p188, %s185, 3
      %s190 = smul.addr %s187, 4
      %s191 = sadd.s32 %s189, %s190
      %s192 = smul.addr %s191, 4
      %s193 = scalar_lea.vmem %s3, %s192
      %s194 = smul.u32 2, %s18
      %s195 = smul.u32 4, %s19
      %p196 = scmp.lt.s32.totalorder %s194, 3
      %s197 = scalar_select %p196, %s194, 3
      %p198 = scmp.lt.s32.totalorder %s195, 3
      %s199 = scalar_select %p198, %s195, 3
      %s200 = smul.addr %s197, 4
      %s201 = sadd.s32 %s199, %s200
      %s202 = smul.addr %s201, 4
      %s203 = scalar_lea.vmem %s0, %s202
      %s204 = smul.u32 2, %s18
      %s205 = smul.u32 4, %s19
      %s206 = smul.u32 2, %s18
      %s207 = smul.u32 4, %s19
      %p208 = scmp.lt.s32.totalorder %s206, 3
      %s209 = scalar_select %p208, %s206, 3
      %p210 = scmp.lt.s32.totalorder %s207, 3
      %s211 = scalar_select %p210, %s207, 3
      %s212 = smul.addr %s209, 4
      %s213 = sadd.s32 %s211, %s212
      %s214 = smul.addr %s213, 4
      %s215 = scalar_lea.vmem %s3, %s214
      %s216 = smul.u32 2, %s18
      %s217 = smul.u32 4, %s19
      %v219 = vld [vmem:[%s203] sm:$0xf]
      %v220 = vld [vmem:[%s203 + $0x4] sm:$0xf]
      %v221 = vld [vmem:[%s203 + $0x8] sm:$0xf]
      %v222 = vld [vmem:[%s203 + $0xc] sm:$0xf]
      %v223 = vld [vmem:[%s203 + $0x10] sm:$0xf]
      %v224 = vld [vmem:[%s203 + $0x14] sm:$0xf]
      %v225 = vld [vmem:[%s203 + $0x18] sm:$0xf]
      %v226 = vld [vmem:[%s203 + $0x1c] sm:$0xf]
      %v227 = vld [vmem:[%s1] sm:$0xf]
      %v228 = vld [vmem:[%s1 + $0x4] sm:$0xf]
      %v229 = vld [vmem:[%s1 + $0x8] sm:$0xf]
      %v230 = vld [vmem:[%s1 + $0xc] sm:$0xf]
      %v231 = vld [vmem:[%s1 + $0x10] sm:$0xf]
      %v232 = vld [vmem:[%s1 + $0x14] sm:$0xf]
      %v233 = vld [vmem:[%s1 + $0x18] sm:$0xf]
      %v234 = vld [vmem:[%s1 + $0x1c] sm:$0xf]
      %v235 = vld [vmem:[%s1 + $0x20] sm:$0xf]
      %v236 = vld [vmem:[%s1 + $0x24] sm:$0xf]
      %v237 = vld [vmem:[%s1 + $0x28] sm:$0xf]
      %v238 = vld [vmem:[%s1 + $0x2c] sm:$0xf]
      %v239 = vld [vmem:[%s1 + $0x30] sm:$0xf]
      %v240 = vld [vmem:[%s1 + $0x34] sm:$0xf]
      %v241 = vld [vmem:[%s1 + $0x38] sm:$0xf]
      %v242 = vld [vmem:[%s1 + $0x3c] sm:$0xf]
      %v243 = vld [vmem:[%s2] sm:$0x1]
      %v245 = vlaneseq
      %v246 = vshrl.u32 %v245, 7
      %v247 = vsub.s32 0, %v246
      %v248 = vrot.slane %v243, %v247
      %v258 = vunpack.c.l.b16 %v219
      %v259 = vunpack.c.l.b16 %v220
      %v260 = vunpack.c.l.b16 %v221
      %v261 = vunpack.c.l.b16 %v222
      %v262 = vunpack.c.l.b16 %v223
      %v263 = vunpack.c.l.b16 %v224
      %v264 = vunpack.c.l.b16 %v225
      %v265 = vunpack.c.l.b16 %v226
      %v266 = vpack.c.b16 %v259, %v258
      %v267 = vpack.c.b16 %v261, %v260
      %v268 = vpack.c.b16 %v263, %v262
      %v269 = vpack.c.b16 %v265, %v264
      %v290 = vunpack.c.l.b16 %v227
      %v291 = vunpack.c.l.b16 %v228
      %v292 = vunpack.c.l.b16 %v229
      %v293 = vunpack.c.l.b16 %v230
      %v294 = vunpack.c.l.b16 %v231
      %v295 = vunpack.c.l.b16 %v232
      %v296 = vunpack.c.l.b16 %v233
      %v297 = vunpack.c.l.b16 %v234
      %v298 = vunpack.c.l.b16 %v235
      %v299 = vunpack.c.l.b16 %v236
      %v300 = vunpack.c.l.b16 %v237
      %v301 = vunpack.c.l.b16 %v238
      %v302 = vunpack.c.l.b16 %v239
      %v303 = vunpack.c.l.b16 %v240
      %v304 = vunpack.c.l.b16 %v241
      %v305 = vunpack.c.l.b16 %v242
      %v306 = vpack.c.b16 %v291, %v290
      %v307 = vpack.c.b16 %v293, %v292
      %v308 = vpack.c.b16 %v295, %v294
      %v309 = vpack.c.b16 %v297, %v296
      %v310 = vpack.c.b16 %v299, %v298
      %v311 = vpack.c.b16 %v301, %v300
      %v312 = vpack.c.b16 %v303, %v302
      %v313 = vpack.c.b16 %v305, %v304
      %322 = vmatprep.subr.bf16.mxu0 0
      %323 = vmatpush1.bf16.msra.mxu0 %v306
      %324 = vmatprep.subr.bf16.mxu0 0
      %325 = vmatpush1.bf16.msra.mxu0 %v307
      %326 = vmatprep.subr.bf16.mxu0 0
      %327 = vmatpush1.bf16.msra.mxu0 %v308
      %328 = vmatprep.subr.bf16.mxu0 0
      %329 = vmatpush1.bf16.msra.mxu0 %v309
      %330 = vmatprep.subr.bf16.mxu0 0
      %331 = vmatpush1.bf16.msra.mxu0 %v310
      %332 = vmatprep.subr.bf16.mxu0 0
      %333 = vmatpush1.bf16.msra.mxu0 %v311
      %334 = vmatprep.subr.bf16.mxu0 0
      %335 = vmatpush1.bf16.msra.mxu0 %v312
      %336 = vmatprep.subr.bf16.mxu0 0
      %337 = vmatpush1.bf16.msra.mxu0 %v313
      %338 = vmatprep.subr.bf16.mxu0 0
      %339 = vmatpush1.bf16.msra.mxu0 0
      %340 = vmatprep.subr.bf16.mxu0 0
      %341 = vmatpush1.bf16.msra.mxu0 0
      %342 = vmatprep.subr.bf16.mxu0 0
      %343 = vmatpush1.bf16.msra.mxu0 0
      %344 = vmatprep.subr.bf16.mxu0 0
      %345 = vmatpush1.bf16.msra.mxu0 0
      %346 = vmatprep.subr.bf16.mxu0 0
      %347 = vmatpush1.bf16.msra.mxu0 0
      %348 = vmatprep.subr.bf16.mxu0 0
      %349 = vmatpush1.bf16.msra.mxu0 0
      %350 = vmatprep.subr.bf16.mxu0 0
      %351 = vmatpush1.bf16.msra.mxu0 0
      %352 = vmatprep.subr.bf16.mxu0 0
      %353 = vmatpush1.bf16.msra.mxu0 0
      %354 = vmatprep.mubr.bf16.mxu0 0
      %355 = vmatmul.mubr.bf16.gmra.mrb[0].mxu0 %v266
      %v356 = vpop.f32.mrb[0].mxu0
      %v357 = vadd.f32 %v248, %v356
      %v358 = vpop.f32.mrb[0].mxu0
      %v359 = vpop.f32.mrb[0].mxu0
      %v360 = vadd.f32 %v248, %v359
      %v361 = vpop.f32.mrb[0].mxu0
      %362 = vmatprep.mubr.bf16.mxu0 0
      %363 = vmatmul.mubr.bf16.gmra.mrb[0].mxu0 %v267
      %v364 = vpop.f32.mrb[0].mxu0
      %v365 = vadd.f32 %v248, %v364
      %v366 = vpop.f32.mrb[0].mxu0
      %v367 = vpop.f32.mrb[0].mxu0
      %v368 = vadd.f32 %v248, %v367
      %v369 = vpop.f32.mrb[0].mxu0
      %370 = vmatprep.mubr.bf16.mxu0 0
      %371 = vmatmul.mubr.bf16.gmra.mrb[0].mxu0 %v268
      %v372 = vpop.f32.mrb[0].mxu0
      %v373 = vadd.f32 %v248, %v372
      %v374 = vpop.f32.mrb[0].mxu0
      %v375 = vpop.f32.mrb[0].mxu0
      %v376 = vadd.f32 %v248, %v375
      %v377 = vpop.f32.mrb[0].mxu0
      %378 = vmatprep.mubr.bf16.mxu0 0
      %379 = vmatmul.mubr.bf16.gmra.mrb[0].mxu0 %v269
      %v380 = vpop.f32.mrb[0].mxu0
      %v381 = vadd.f32 %v248, %v380
      %v382 = vpop.f32.mrb[0].mxu0
      %v383 = vpop.f32.mrb[0].mxu0
      %v384 = vadd.f32 %v248, %v383
      %v385 = vpop.f32.mrb[0].mxu0
      %386 = vdwg.mxu0
      %v387 = vmax.f32 %v357, 0.0
      %v388 = vmax.f32 %v360, 0.0
      %v389 = vmax.f32 %v365, 0.0
      %v390 = vmax.f32 %v368, 0.0
      %v391 = vmax.f32 %v373, 0.0
      %v392 = vmax.f32 %v376, 0.0
      %v393 = vmax.f32 %v381, 0.0
      %v394 = vmax.f32 %v384, 0.0
      %v395 = vpack.c.bf16 %v388, %v387
      %v396 = vpack.c.bf16 %v390, %v389
      %v397 = vpack.c.bf16 %v392, %v391
      %v398 = vpack.c.bf16 %v394, %v393
      %v403 = vunpack.c.l.b16 %v395
      %v404 = vunpack.c.h.b16 %v395
      %v405 = vunpack.c.l.b16 %v396
      %v406 = vunpack.c.h.b16 %v396
      %v407 = vunpack.c.l.b16 %v397
      %v408 = vunpack.c.h.b16 %v397
      %v409 = vunpack.c.l.b16 %v398
      %v410 = vunpack.c.h.b16 %v398
      %v411 = vpack.c.b16 %v403, %v403
      %v412 = vpack.c.b16 %v404, %v404
      %v413 = vpack.c.b16 %v405, %v405
      %v414 = vpack.c.b16 %v406, %v406
      %v415 = vpack.c.b16 %v407, %v407
      %v416 = vpack.c.b16 %v408, %v408
      %v417 = vpack.c.b16 %v409, %v409
      %v418 = vpack.c.b16 %v410, %v410
      %427 = vst [vmem:[%s215] sm:$0xf] %v411
      %428 = vst [vmem:[%s215 + $0x4] sm:$0xf] %v412
      %429 = vst [vmem:[%s215 + $0x8] sm:$0xf] %v413
      %430 = vst [vmem:[%s215 + $0xc] sm:$0xf] %v414
      %431 = vst [vmem:[%s215 + $0x10] sm:$0xf] %v415
      %432 = vst [vmem:[%s215 + $0x14] sm:$0xf] %v416
      %433 = vst [vmem:[%s215 + $0x18] sm:$0xf] %v417
      %434 = vst [vmem:[%s215 + $0x1c] sm:$0xf] %v418
      %s435 = smul.u32 2, %s18
      %s436 = smul.u32 4, %s19
      %p437 = scmp.lt.s32.totalorder %s435, 3
      %s438 = scalar_select %p437, %s435, 3
      %p439 = scmp.lt.s32.totalorder %s436, 3
      %s440 = scalar_select %p439, %s436, 3
      %s441 = smul.addr %s438, 4
      %s442 = sadd.s32 %s440, %s441
      %s443 = smul.addr %s442, 4
      %s444 = scalar_lea.vmem %s3, %s443
      // Predicated region
      $region33: #{conv_block_forward.1} parent=31 // pred_check
        %p445 = pneg %p116
      $region34: #{conv_block_forward.1} parent=31 // pred_check_branch
        %447 = sbr.rel (%p445) target = $region36
      $region35: #{conv_block_forward.1} parent=31 // pred_region
        %s448 = smul.u32 2, %s18
        %s449 = smul.u32 4, %s19
      $region36: #{conv_block_forward.1} parent=31 // pred_fallthru
        _
    $region32: #{conv_block_forward.1} parent=5 // pred_fallthru
      _
    %p450 = scmp.le.s32.totalorder 2, %s9
    // Predicated region
    $region37: #{conv_block_forward.1} parent=5 // pred_check
      %p451 = pneg %p450
    $region38: #{conv_block_forward.1} parent=5 // pred_check_branch
      %453 = sbr.rel (%p451) target = $region40
    $region39: #{conv_block_forward.1} parent=5 // pred_region
      %s454 = ssub.s32 %s9, 2
      // Predicated region
      $region41: #{conv_block_forward.1} parent=39 // pred_check
        %p455 = pneg %p122
      $region42: #{conv_block_forward.1} parent=39 // pred_check_branch
        %457 = sbr.rel (%p455) target = $region44
      $region43: #{conv_block_forward.1} parent=39 // pred_region
        %s458 = smul.u32 2, %s20
        %s459 = smul.u32 4, %s21
        %p460 = scmp.lt.s32.totalorder %s458, 3
        %s461 = scalar_select %p460, %s458, 3
        %p462 = scmp.lt.s32.totalorder %s459, 3
        %s463 = scalar_select %p462, %s459, 3
        %s464 = smul.addr %s461, 4
        %s465 = sadd.s32 %s463, %s464
        %s466 = smul.addr %s465, 4
        %s467 = scalar_lea.vmem %s3, %s466
      $region44: #{conv_block_forward.1} parent=39 // pred_fallthru
        _
    $region40: #{conv_block_forward.1} parent=5 // pred_fallthru
      _
  $region6: #{conv_block_forward.1} parent=0 // loop_footer
    %s13 = sadd.s32 1, %s9
  $region7: #{conv_block_forward.1} parent=0 // loop_footer_branch
    %8 = sbr.rel target = $region3
  $region8: #{conv_block_forward.1} parent=0 // loop_exit
    _

</llo_original>
